<compile_context>
chip_gen: v6e
topology: v6e:2x2x1
jax: 0.10.0
libtpu: 0.0.40
codegen_flags: <defaults>
</compile_context>

<pallas_src>
import jax
import jax.numpy as jnp
from jax.experimental import pallas as pl
from jax.experimental.pallas import tpu as pltpu

NUM_ACTIONS = 9
IN_FEATURES = 2
HIDDEN = 200
HIDDEN_PAD = 256          # lane-dense hidden (2 full f32 vregs, one MXU pass)
OUT_PAD = 128             # lane-dense output vreg
NEG_BIG = -1e30           # bias for padded logit columns -> exp underflows to 0


def _policy_kernel(x_ref, w1_ref, b1_ref, w2_ref, b2_ref, out_ref):
    x = x_ref[...]                                   # (TB, 2)
    w1 = w1_ref[...]                                 # (2, 256)

    # Layer 1: K=2 contraction -> two VPU broadcast FMAs (skip the MXU).
    h = x[:, 0:1] * w1[0:1, :] + x[:, 1:2] * w1[1:2, :] + b1_ref[...]
    h = jnp.maximum(h, 0.0)                          # ReLU, (TB, 256)

    # Layer 2: (TB,256) @ (256,128) -> single MXU pass, lane-dense logits.
    s = jnp.dot(h, w2_ref[...], preferred_element_type=jnp.float32) + b2_ref[...]

    # Numerically stable softmax over the (padded) action lanes.
    m = jnp.max(s, axis=-1, keepdims=True)
    e = jnp.exp(s - m)                               # padded lanes -> exactly 0
    denom = jnp.sum(e, axis=-1, keepdims=True)
    out_ref[...] = e * pl.reciprocal(denom, approx=False)


def policy_forward(x, w1, b1, w2, b2, *, block_b=128):
    """x: (B, 2); w1: (2, 200); b1: (1, 200); w2: (200, 9); b2: (1, 9)."""
    B = x.shape[0]

    # --- pad parameters to lane-dense shapes (zero pads are numerically exact) ---
    w1p = jnp.zeros((IN_FEATURES, HIDDEN_PAD), jnp.float32).at[:, :HIDDEN].set(
        w1.astype(jnp.float32))
    b1p = jnp.zeros((1, HIDDEN_PAD), jnp.float32).at[:, :HIDDEN].set(
        jnp.reshape(b1, (1, HIDDEN)).astype(jnp.float32))
    w2p = jnp.zeros((HIDDEN_PAD, OUT_PAD), jnp.float32).at[:HIDDEN, :NUM_ACTIONS].set(
        w2.astype(jnp.float32))
    b2p = jnp.full((1, OUT_PAD), NEG_BIG, jnp.float32).at[:, :NUM_ACTIONS].set(
        jnp.reshape(b2, (1, NUM_ACTIONS)).astype(jnp.float32))

    # --- pad / tile the batch axis (rows multiple of 8 for sublane alignment) ---
    tb = block_b if B >= block_b else max(8, ((B + 7) // 8) * 8)
    Bp = ((B + tb - 1) // tb) * tb
    xp = jnp.zeros((Bp, IN_FEATURES), jnp.float32).at[:B, :].set(
        x.astype(jnp.float32))

    out = pl.pallas_call(
        _policy_kernel,
        out_shape=jax.ShapeDtypeStruct((Bp, OUT_PAD), jnp.float32),
        grid=(Bp // tb,),
        in_specs=[
            pl.BlockSpec((tb, IN_FEATURES), lambda i: (i, 0)),
            pl.BlockSpec((IN_FEATURES, HIDDEN_PAD), lambda i: (0, 0)),
            pl.BlockSpec((1, HIDDEN_PAD), lambda i: (0, 0)),
            pl.BlockSpec((HIDDEN_PAD, OUT_PAD), lambda i: (0, 0)),
            pl.BlockSpec((1, OUT_PAD), lambda i: (0, 0)),
        ],
        out_specs=pl.BlockSpec((tb, OUT_PAD), lambda i: (i, 0)),
        compiler_params=pltpu.CompilerParams(
            dimension_semantics=("parallel",)),  # batch axis -> both TCs on v7x
    )(xp, w1p, b1p, w2p, b2p)

    return out[:B, :NUM_ACTIONS]


def init_params(key):
    """Deterministic init mimicking nn.Linear's default U(-1/sqrt(fan_in), +)."""
    k1, k2, k3, k4 = jax.random.split(key, 4)
    bound1 = 1.0 / jnp.sqrt(IN_FEATURES)
    bound2 = 1.0 / jnp.sqrt(HIDDEN)
    w1 = jax.random.uniform(k1, (IN_FEATURES, HIDDEN), jnp.float32, -bound1, bound1)
    b1 = jax.random.uniform(k2, (1, HIDDEN), jnp.float32, -bound1, bound1)
    w2 = jax.random.uniform(k3, (HIDDEN, NUM_ACTIONS), jnp.float32, -bound2, bound2)
    b2 = jax.random.uniform(k4, (1, NUM_ACTIONS), jnp.float32, -bound2, bound2)
    return w1, b1, w2, b2


def reference_forward(x, w1, b1, w2, b2):
    h = jnp.maximum(x @ w1 + b1, 0.0)
    s = h @ w2 + b2
    return jax.nn.softmax(s, axis=1)


# TODO(synk): select_action's Categorical sampling / log-prob bookkeeping is host-side
# training-loop logic, not part of the module forward pass, and is left out.

if __name__ == "__main__":
    key = jax.random.PRNGKey(0)
    kx, kp = jax.random.split(key)

    B = 2
    x = jax.random.normal(kx, (B, IN_FEATURES), jnp.float32)
    w1, b1, w2, b2 = init_params(kp)

    fwd = jax.jit(policy_forward)
    probs = fwd(x, w1, b1, w2, b2)
    jax.block_until_ready(probs)

    ref = reference_forward(x, w1, b1, w2, b2)
    assert probs.shape == (B, NUM_ACTIONS)
    assert jnp.allclose(probs, ref, atol=1e-5, rtol=1e-5)
    assert jnp.allclose(jnp.sum(probs, axis=1), 1.0, atol=1e-5)

    # Also exercise a gridded (multi-block) batch to validate the "parallel" path.
    B2 = 300
    x2 = jax.random.normal(kx, (B2, IN_FEATURES), jnp.float32)
    probs2 = fwd(x2, w1, b1, w2, b2)
    jax.block_until_ready(probs2)
    ref2 = reference_forward(x2, w1, b1, w2, b2)
    assert probs2.shape == (B2, NUM_ACTIONS)
    assert jnp.allclose(probs2, ref2, atol=1e-5, rtol=1e-5)

    print("KERNEL_OK")
</pallas_src>

<mosaic_0001>
module attributes {stable_mosaic.version = 11 : i64} {
  func.func @_policy_kernel(%arg0: i32, %arg1: memref<8x2xf32, #tpu.memory_space<vmem>>, %arg2: memref<2x256xf32, #tpu.memory_space<vmem>>, %arg3: memref<1x256xf32, #tpu.memory_space<vmem>>, %arg4: memref<256x128xf32, #tpu.memory_space<vmem>>, %arg5: memref<1x128xf32, #tpu.memory_space<vmem>>, %arg6: memref<8x128xf32, #tpu.memory_space<vmem>>) attributes {dimension_semantics = [#tpu.dimension_semantics<parallel>], iteration_bounds = array<i64: 1>, scalar_prefetch = 0 : i64, scratch_operands = 0 : i64, tpu.core_type = #tpu.core_type<tc>, window_params = [{transform_indices = @transform_0, window_bounds = array<i64: 8, 2>}, {pipeline_mode = #tpu.pipeline_mode<synchronous>, transform_indices = @transform_1, window_bounds = array<i64: 2, 256>}, {pipeline_mode = #tpu.pipeline_mode<synchronous>, transform_indices = @transform_2, window_bounds = array<i64: 1, 256>}, {pipeline_mode = #tpu.pipeline_mode<synchronous>, transform_indices = @transform_3, window_bounds = array<i64: 256, 128>}, {pipeline_mode = #tpu.pipeline_mode<synchronous>, transform_indices = @transform_4, window_bounds = array<i64: 1, 128>}, {transform_indices = @transform_5, window_bounds = array<i64: 8, 128>}]} {
    %c0 = arith.constant 0 : index
    %c0_0 = arith.constant 0 : index
    %0 = vector.load %arg1[%c0, %c0_0] : memref<8x2xf32, #tpu.memory_space<vmem>>, vector<8x2xf32>
    %c0_1 = arith.constant 0 : index
    %c0_2 = arith.constant 0 : index
    %1 = vector.load %arg2[%c0_1, %c0_2] : memref<2x256xf32, #tpu.memory_space<vmem>>, vector<2x256xf32>
    %2 = vector.extract_strided_slice %0 {offsets = [0, 0], sizes = [8, 1], strides = [1, 1]} : vector<8x2xf32> to vector<8x1xf32>
    %3 = vector.extract_strided_slice %1 {offsets = [0, 0], sizes = [1, 256], strides = [1, 1]} : vector<2x256xf32> to vector<1x256xf32>
    %4 = vector.broadcast %2 : vector<8x1xf32> to vector<8x256xf32>
    %5 = vector.broadcast %3 : vector<1x256xf32> to vector<8x256xf32>
    %6 = arith.mulf %4, %5 : vector<8x256xf32>
    %7 = vector.extract_strided_slice %0 {offsets = [0, 1], sizes = [8, 1], strides = [1, 1]} : vector<8x2xf32> to vector<8x1xf32>
    %8 = vector.extract_strided_slice %1 {offsets = [1, 0], sizes = [1, 256], strides = [1, 1]} : vector<2x256xf32> to vector<1x256xf32>
    %9 = vector.broadcast %7 : vector<8x1xf32> to vector<8x256xf32>
    %10 = vector.broadcast %8 : vector<1x256xf32> to vector<8x256xf32>
    %11 = arith.mulf %9, %10 : vector<8x256xf32>
    %12 = arith.addf %6, %11 : vector<8x256xf32>
    %c0_3 = arith.constant 0 : index
    %c0_4 = arith.constant 0 : index
    %13 = vector.load %arg3[%c0_3, %c0_4] : memref<1x256xf32, #tpu.memory_space<vmem>>, vector<1x256xf32>
    %14 = vector.broadcast %13 : vector<1x256xf32> to vector<8x256xf32>
    %15 = arith.addf %12, %14 : vector<8x256xf32>
    %cst = arith.constant 0.000000e+00 : f32
    %16 = vector.broadcast %cst : f32 to vector<8x256xf32>
    %17 = arith.maximumf %15, %16 : vector<8x256xf32>
    %c0_5 = arith.constant 0 : index
    %c0_6 = arith.constant 0 : index
    %18 = vector.load %arg4[%c0_5, %c0_6] : memref<256x128xf32, #tpu.memory_space<vmem>>, vector<256x128xf32>
    %cst_7 = arith.constant dense<0.000000e+00> : vector<8x128xf32>
    %19 = tpu.matmul %17, %18, %cst_7 {dimension_numbers = #tpu.dot_dimension_numbers<[1], [0], [0], [1], [0, 0, 1, 1], [], []>} : vector<8x256xf32>, vector<256x128xf32>, vector<8x128xf32> -> vector<8x128xf32>
    %c0_8 = arith.constant 0 : index
    %c0_9 = arith.constant 0 : index
    %20 = vector.load %arg5[%c0_8, %c0_9] : memref<1x128xf32, #tpu.memory_space<vmem>>, vector<1x128xf32>
    %21 = vector.broadcast %20 : vector<1x128xf32> to vector<8x128xf32>
    %22 = arith.addf %19, %21 : vector<8x128xf32>
    %cst_10 = arith.constant dense<0xFF800000> : vector<8xf32>
    %23 = vector.multi_reduction <maximumf>, %22, %cst_10 [1] : vector<8x128xf32> to vector<8xf32>
    %24 = vector.shape_cast %23 : vector<8xf32> to vector<8x1xf32>
    %25 = vector.broadcast %24 : vector<8x1xf32> to vector<8x128xf32>
    %26 = arith.subf %22, %25 : vector<8x128xf32>
    %27 = math.exp %26 : vector<8x128xf32>
    %cst_11 = arith.constant dense<0.000000e+00> : vector<8xf32>
    %28 = vector.multi_reduction <add>, %27, %cst_11 [1] : vector<8x128xf32> to vector<8xf32>
    %29 = vector.shape_cast %28 : vector<8xf32> to vector<8x1xf32>
    %30 = tpu.reciprocal %29 : vector<8x1xf32> -> vector<8x1xf32>
    %31 = vector.broadcast %30 : vector<8x1xf32> to vector<8x128xf32>
    %32 = arith.mulf %27, %31 : vector<8x128xf32>
    %c0_12 = arith.constant 0 : index
    %c0_13 = arith.constant 0 : index
    %33 = vector.load %arg6[%c0_12, %c0_13] : memref<8x128xf32, #tpu.memory_space<vmem>>, vector<8x128xf32>
    tpu.vector_store %arg6[%c0_12, %c0_13], %32 {strides = array<i32>} : memref<8x128xf32, #tpu.memory_space<vmem>>, vector<8x128xf32>,
    return
  }
  func.func @transform_0(%arg0: i32) -> (i32, i32) {
    %c0_i32 = arith.constant 0 : i32
    %c0_i32_0 = arith.constant 0 : i32
    return %arg0, %c0_i32 : i32, i32
  }
  func.func @transform_1(%arg0: i32) -> (i32, i32) {
    %c0_i32 = arith.constant 0 : i32
    %c0_i32_0 = arith.constant 0 : i32
    %c0_i32_1 = arith.constant 0 : i32
    return %c0_i32, %c0_i32_0 : i32, i32
  }
  func.func @transform_2(%arg0: i32) -> (i32, i32) {
    %c0_i32 = arith.constant 0 : i32
    %c0_i32_0 = arith.constant 0 : i32
    %c0_i32_1 = arith.constant 0 : i32
    return %c0_i32, %c0_i32_0 : i32, i32
  }
  func.func @transform_3(%arg0: i32) -> (i32, i32) {
    %c0_i32 = arith.constant 0 : i32
    %c0_i32_0 = arith.constant 0 : i32
    %c0_i32_1 = arith.constant 0 : i32
    return %c0_i32, %c0_i32_0 : i32, i32
  }
  func.func @transform_4(%arg0: i32) -> (i32, i32) {
    %c0_i32 = arith.constant 0 : i32
    %c0_i32_0 = arith.constant 0 : i32
    %c0_i32_1 = arith.constant 0 : i32
    return %c0_i32, %c0_i32_0 : i32, i32
  }
  func.func @transform_5(%arg0: i32) -> (i32, i32) {
    %c0_i32 = arith.constant 0 : i32
    %c0_i32_0 = arith.constant 0 : i32
    return %arg0, %c0_i32 : i32, i32
  }
}

</mosaic_0001>

<llo_original>
// kernel: policy_forward.1
$region0: #{policy_forward.1}
  #allocation0 [shape = 'u32[]', space=smem, size = 0x4, offset = 0x4, fixed_abs, tag = 'smem constant byte address 0x4 - core index']
  #allocation1 [shape = 'u32[144,128]{1,0:T(1,128)}', space=vmem, size = 0x12000, scoped, tag = 'internal scratch']
  %s0 = inlined_call_operand.vmem [shape: f32[8,2], index: 0, kind: input, shape index: {}]
  %s1 = inlined_call_operand.vmem [shape: f32[2,256], index: 1, kind: input, shape index: {}]
  %s2 = inlined_call_operand.vmem [shape: f32[1,256], index: 2, kind: input, shape index: {}]
  %s3 = inlined_call_operand.vmem [shape: f32[256,128], index: 3, kind: input, shape index: {}]
  %s4 = inlined_call_operand.vmem [shape: f32[1,128], index: 4, kind: input, shape index: {}]
  %s5 = inlined_call_operand.vmem [shape: f32[8,128], index: 5, kind: output, shape index: {}]
  %s6 = sld [smem:[#allocation0]]
  $region30: #{policy_forward.1} parent=0
    _
  %s8 = ssub.s32 1, %s6
  %s9 = scalar_select 0, %s8, %s6
  // Predicated region
  $region2: #{policy_forward.1} parent=0 // pred_check
    _
  $region3: #{policy_forward.1} parent=0 // pred_check_branch
    %11 = sbr.rel (0) target = $region5
  $region4: #{policy_forward.1} parent=0 // pred_region
    _
  $region5: #{policy_forward.1} parent=0 // pred_fallthru
    _
  // Predicated region
  $region6: #{policy_forward.1} parent=0 // pred_check
    _
  $region7: #{policy_forward.1} parent=0 // pred_check_branch
    %13 = sbr.rel (0) target = $region9
  $region8: #{policy_forward.1} parent=0 // pred_region
    _
  $region9: #{policy_forward.1} parent=0 // pred_fallthru
    _
  // Predicated region
  $region10: #{policy_forward.1} parent=0 // pred_check
    _
  $region11: #{policy_forward.1} parent=0 // pred_check_branch
    %15 = sbr.rel (0) target = $region13
  $region12: #{policy_forward.1} parent=0 // pred_region
    _
  $region13: #{policy_forward.1} parent=0 // pred_fallthru
    _
  // Predicated region
  $region14: #{policy_forward.1} parent=0 // pred_check
    _
  $region15: #{policy_forward.1} parent=0 // pred_check_branch
    %17 = sbr.rel (0) target = $region17
  $region16: #{policy_forward.1} parent=0 // pred_region
    _
  $region17: #{policy_forward.1} parent=0 // pred_fallthru
    _
  // Predicated region
  $region18: #{policy_forward.1} parent=0 // pred_check
    _
  $region19: #{policy_forward.1} parent=0 // pred_check_branch
    %19 = sbr.rel (0) target = $region21
  $region20: #{policy_forward.1} parent=0 // pred_region
    _
  $region21: #{policy_forward.1} parent=0 // pred_fallthru
    _
  %v20 = vld [vmem:[%s0] sm:$0xff]
  %v21 = vld [vmem:[%s1] sm:$0xf]
  %23 = vset.pattern.permute.xlu0 0
  %24 = vperm.xlu0 %23, %v20
  %v25 = vpop.permute.xlu0 %24
  %v28 = vlaneseq
  %v29 = vshrl.u32 %v28, 7
  %v30 = vsub.s32 0, %v29
  %v31 = vrot.slane %v21, %v30
  %v32 = vlaneseq
  %v33 = vshrl.u32 %v32, 7
  %v34 = vsub.s32 2, %v33
  %v35 = vrot.slane %v21, %v34
  %v38 = vlaneseq
  %v39 = vshrl.u32 %v38, 7
  %v40 = vsub.s32 0, %v39
  %v41 = vrot.slane %v31, %v40
  %v42 = vlaneseq
  %v43 = vshrl.u32 %v42, 7
  %v44 = vsub.s32 0, %v43
  %v45 = vrot.slane %v35, %v44
  %v46 = vmul.f32 %v25, %v41
  %v47 = vmul.f32 %v25, %v45
  %48 = vset.pattern.permute.xlu0 1
  %49 = vperm.xlu0 %48, %v20
  %v50 = vpop.permute.xlu0 %49
  %v52 = vlaneseq
  %v53 = vshrl.u32 %v52, 7
  %v54 = vsub.s32 1, %v53
  %v55 = vrot.slane %v21, %v54
  %v56 = vlaneseq
  %v57 = vshrl.u32 %v56, 7
  %v58 = vsub.s32 3, %v57
  %v59 = vrot.slane %v21, %v58
  %v62 = vlaneseq
  %v63 = vshrl.u32 %v62, 7
  %v64 = vsub.s32 1, %v63
  %v65 = vrot.slane %v55, %v64
  %v66 = vlaneseq
  %v67 = vshrl.u32 %v66, 7
  %v68 = vsub.s32 1, %v67
  %v69 = vrot.slane %v59, %v68
  %v70 = vmul.f32 %v50, %v65
  %v71 = vmul.f32 %v50, %v69
  %v72 = vadd.f32 %v46, %v70
  %v73 = vadd.f32 %v47, %v71
  %v74 = vld [vmem:[%s2] sm:$0x3]
  %v76 = vlaneseq
  %v77 = vshrl.u32 %v76, 7
  %v78 = vsub.s32 0, %v77
  %v79 = vrot.slane %v74, %v78
  %v80 = vlaneseq
  %v81 = vshrl.u32 %v80, 7
  %v82 = vsub.s32 1, %v81
  %v83 = vrot.slane %v74, %v82
  %v86 = vadd.f32 %v72, %v79
  %v87 = vadd.f32 %v73, %v83
  %v88 = vmax.f32 %v86, 0.0
  %v89 = vmax.f32 %v87, 0.0
  %v90 = vld [vmem:[%s3] sm:$0xff]
  %v91 = vld [vmem:[%s3 + $0x8] sm:$0xff]
  %v92 = vld [vmem:[%s3 + $0x10] sm:$0xff]
  %v93 = vld [vmem:[%s3 + $0x18] sm:$0xff]
  %v94 = vld [vmem:[%s3 + $0x20] sm:$0xff]
  %v95 = vld [vmem:[%s3 + $0x28] sm:$0xff]
  %v96 = vld [vmem:[%s3 + $0x30] sm:$0xff]
  %v97 = vld [vmem:[%s3 + $0x38] sm:$0xff]
  %v98 = vld [vmem:[%s3 + $0x40] sm:$0xff]
  %v99 = vld [vmem:[%s3 + $0x48] sm:$0xff]
  %v100 = vld [vmem:[%s3 + $0x50] sm:$0xff]
  %v101 = vld [vmem:[%s3 + $0x58] sm:$0xff]
  %v102 = vld [vmem:[%s3 + $0x60] sm:$0xff]
  %v103 = vld [vmem:[%s3 + $0x68] sm:$0xff]
  %v104 = vld [vmem:[%s3 + $0x70] sm:$0xff]
  %v105 = vld [vmem:[%s3 + $0x78] sm:$0xff]
  %v106 = vld [vmem:[%s3 + $0x80] sm:$0xff]
  %v107 = vld [vmem:[%s3 + $0x88] sm:$0xff]
  %v108 = vld [vmem:[%s3 + $0x90] sm:$0xff]
  %v109 = vld [vmem:[%s3 + $0x98] sm:$0xff]
  %v110 = vld [vmem:[%s3 + $0xa0] sm:$0xff]
  %v111 = vld [vmem:[%s3 + $0xa8] sm:$0xff]
  %v112 = vld [vmem:[%s3 + $0xb0] sm:$0xff]
  %v113 = vld [vmem:[%s3 + $0xb8] sm:$0xff]
  %v114 = vld [vmem:[%s3 + $0xc0] sm:$0xff]
  %v115 = vld [vmem:[%s3 + $0xc8] sm:$0xff]
  %v116 = vld [vmem:[%s3 + $0xd0] sm:$0xff]
  %v117 = vld [vmem:[%s3 + $0xd8] sm:$0xff]
  %v118 = vld [vmem:[%s3 + $0xe0] sm:$0xff]
  %v119 = vld [vmem:[%s3 + $0xe8] sm:$0xff]
  %v120 = vld [vmem:[%s3 + $0xf0] sm:$0xff]
  %v121 = vld [vmem:[%s3 + $0xf8] sm:$0xff]
  %v122 = vld [vmem:[%s4] sm:$0x1]
  %v124 = vlaneseq
  %v125 = vshrl.u32 %v124, 7
  %v126 = vsub.s32 0, %v125
  %v127 = vrot.slane %v122, %v126
  %129 = vmatprep.subr.mxu0 0.0
  %130 = vmatpush1.msra.mxu0 %v105
  %131 = vmatprep.subr.mxu0 0.0
  %132 = vmatpush1.msra.mxu0 %v104
  %133 = vmatprep.subr.mxu0 0.0
  %134 = vmatpush1.msra.mxu0 %v103
  %135 = vmatprep.subr.mxu0 0.0
  %136 = vmatpush1.msra.mxu0 %v102
  %137 = vmatprep.subr.mxu0 0.0
  %138 = vmatpush1.msra.mxu0 %v101
  %139 = vmatprep.subr.mxu0 0.0
  %140 = vmatpush1.msra.mxu0 %v100
  %141 = vmatprep.subr.mxu0 0.0
  %142 = vmatpush1.msra.mxu0 %v99
  %143 = vmatprep.subr.mxu0 0.0
  %144 = vmatpush1.msra.mxu0 %v98
  %145 = vmatprep.subr.mxu0 0.0
  %146 = vmatpush1.msra.mxu0 %v97
  %147 = vmatprep.subr.mxu0 0.0
  %148 = vmatpush1.msra.mxu0 %v96
  %149 = vmatprep.subr.mxu0 0.0
  %150 = vmatpush1.msra.mxu0 %v95
  %151 = vmatprep.subr.mxu0 0.0
  %152 = vmatpush1.msra.mxu0 %v94
  %153 = vmatprep.subr.mxu0 0.0
  %154 = vmatpush1.msra.mxu0 %v93
  %155 = vmatprep.subr.mxu0 0.0
  %156 = vmatpush1.msra.mxu0 %v92
  %157 = vmatprep.subr.mxu0 0.0
  %158 = vmatpush1.msra.mxu0 %v91
  %159 = vmatprep.subr.mxu0 0.0
  %160 = vmatpush1.msra.mxu0 %v90
  %161 = vmatprep.subr.mxu0 0.0
  %162 = vmatpush2.msra.mxu0 %v121
  %163 = vmatprep.subr.mxu0 0.0
  %164 = vmatpush2.msra.mxu0 %v120
  %165 = vmatprep.subr.mxu0 0.0
  %166 = vmatpush2.msra.mxu0 %v119
  %167 = vmatprep.subr.mxu0 0.0
  %168 = vmatpush2.msra.mxu0 %v118
  %169 = vmatprep.subr.mxu0 0.0
  %170 = vmatpush2.msra.mxu0 %v117
  %171 = vmatprep.subr.mxu0 0.0
  %172 = vmatpush2.msra.mxu0 %v116
  %173 = vmatprep.subr.mxu0 0.0
  %174 = vmatpush2.msra.mxu0 %v115
  %175 = vmatprep.subr.mxu0 0.0
  %176 = vmatpush2.msra.mxu0 %v114
  %177 = vmatprep.subr.mxu0 0.0
  %178 = vmatpush2.msra.mxu0 %v113
  %179 = vmatprep.subr.mxu0 0.0
  %180 = vmatpush2.msra.mxu0 %v112
  %181 = vmatprep.subr.mxu0 0.0
  %182 = vmatpush2.msra.mxu0 %v111
  %183 = vmatprep.subr.mxu0 0.0
  %184 = vmatpush2.msra.mxu0 %v110
  %185 = vmatprep.subr.mxu0 0.0
  %186 = vmatpush2.msra.mxu0 %v109
  %187 = vmatprep.subr.mxu0 0.0
  %188 = vmatpush2.msra.mxu0 %v108
  %189 = vmatprep.subr.mxu0 0.0
  %190 = vmatpush2.msra.mxu0 %v107
  %191 = vmatprep.subr.mxu0 0.0
  %192 = vmatpush2.msra.mxu0 %v106
  %193 = vmatprep.mubr.f32.mxu0 %v89
  %194 = vmatmul.mubr.f32.gmra.mxu0 %v88
  %v195 = vpop.f32.mrf.mxu0
  %v196 = vadd.f32 %v127, %v195
  %v197 = vpop.f32.mrf.mxu0
  %198 = vdwg.mxu0
  %199 = vmax.xlane.f32.xlu0 %v196
  %v200 = vpop.xlane.xlu0 %199
  %v201 = vsub.f32 %v196, %v200
  %v202 = vmul.f32 %v201, 1.442695
  %v203 = vpow.pop %v202
  %204 = vadd.xlane.f32.xlu0 %v203
  %v205 = vpop.xlane.xlu0 %204
  %v206 = vrcp.pop %v205
  %v207 = vmul.f32 %v203, %v206
  %208 = vst [vmem:[%s5] sm:$0xff] %v207
  // Predicated region
  $region22: #{policy_forward.1} parent=0 // pred_check
    _
  $region23: #{policy_forward.1} parent=0 // pred_check_branch
    %210 = sbr.rel (0) target = $region25
  $region24: #{policy_forward.1} parent=0 // pred_region
    _
  $region25: #{policy_forward.1} parent=0 // pred_fallthru
    _
  // Predicated region
  $region26: #{policy_forward.1} parent=0 // pred_check
    _
  $region27: #{policy_forward.1} parent=0 // pred_check_branch
    %212 = sbr.rel (0) target = $region29
  $region28: #{policy_forward.1} parent=0 // pred_region
    _
  $region29: #{policy_forward.1} parent=0 // pred_fallthru
    _

</llo_original>
